<compile_context>
chip_gen: v6e
topology: v6e:2x2x1
jax: 0.10.0
libtpu: 0.0.40
codegen_flags: <defaults>
</compile_context>

<pallas_src>
import jax
import jax.numpy as jnp
from jax.experimental import pallas as pl
from jax.experimental.pallas import tpu as pltpu

# --- small, module-consistent sizes -----------------------------------------
B = 2                               # batch
C, H, W = 3, 32, 32
P = 8                               # patch size -> L = (H/P)*(W/P) tokens
L = (H // P) * (W // P)             # 16 local tokens  (analog of 196 in ViT-B/16)
F = 128                             # local feature dim (analog of 768)
G = 64                              # global feature dim (analog of 512)
PATCH_DIM = C * P * P               # 192
PK = 256                            # PATCH_DIM zero-padded to a lane-dense K
ROWS = 2 * B * L                    # 64 token rows (global images + local images)

assert 2 * B <= 8, "pooled slicing / output slab assume 2*B rows fit one vreg sublane set"


# ----------------------------------------------------------------------------
# Fused kernel:
#   tok     = patches_all @ W_embed                   (2B*L, F)  MXU, bf16 in / f32 acc
#   pooled  = mean over L tokens per image            (2B, F)    reshape + sublane sum
#   quality = pooled_g.(w_proj@Wg) + pooled_l.Wl + b  (B, 1)     VPU mul + lane reduce
#   out     = lane-dense (8, 128) slab, quality in [:B, :1]
# ----------------------------------------------------------------------------
def _fused_kernel(p_ref, we_ref, hp_ref, out_ref):
    # Patch embedding for both image stacks in one MXU matmul (bf16 -> f32 acc).
    tok = jnp.dot(p_ref[...], we_ref[...],
                  preferred_element_type=jnp.float32)                 # (ROWS, F) f32

    # Per-image token mean: reshape splits the sublane axis only (lane dim kept).
    pooled = jnp.sum(tok.reshape(2 * B, L, F), axis=1) * (1.0 / L)    # (2B, F) f32

    # Folded QualityFusionHead (frozen w_proj folded into the head offline):
    #   row 0: v_comb = w_proj @ Wg   row 1: Wl   row 2: bias (broadcast)
    hp = hp_ref[...]                                                  # (3, F) f32
    q = (jnp.sum(pooled[0:B] * hp[0:1, :], axis=-1, keepdims=True)
         + jnp.sum(pooled[B:2 * B] * hp[1:2, :], axis=-1, keepdims=True)
         + hp[2:3, 0:1])                                              # (B, 1) f32

    # Lane-dense output slab: broadcast across lanes, zero-pad sublanes -> one
    # full unmasked (8, 128) store. Wrapper slices [:B, :1].
    q_rows = jnp.broadcast_to(q, (B, 128))
    out_ref[...] = jnp.concatenate(
        [q_rows, jnp.zeros((8 - B, 128), jnp.float32)], axis=0)


def prepare_params(params):
    """One-time frozen-weight preprocessing (hoisted out of the forward)."""
    # Zero-pad K of the embedding weight 192 -> 256; MXU inputs in bf16.
    w_embed = jnp.pad(params["w_embed"],
                      ((0, PK - PATCH_DIM), (0, 0))).astype(jnp.bfloat16)   # (PK, F)
    # Algebraic fold: gf . Wg = pooled_g . (w_proj @ Wg), done once in f32.
    v_comb = (params["w_proj"] @ params["head_w"][:G, 0]).astype(jnp.float32)  # (F,)
    wl = params["head_w"][G:, 0].astype(jnp.float32)                            # (F,)
    bias = jnp.full((F,), params["head_b"][0], jnp.float32)
    head_pack = jnp.stack([v_comb, wl, bias], axis=0)                           # (3, F)
    return w_embed, head_pack


def local_global_clip_iqa(x_global, x_local, w_embed_packed, head_pack):
    # Plain-JAX glue: patchify both image stacks at once (reshape/transpose);
    # pad + bf16 cast fuse with it inside the surrounding jit.
    x = jnp.concatenate([x_global, x_local], axis=0)                  # (2B, C, H, W)
    xb = x.reshape(2 * B, C, H // P, P, W // P, P)
    xb = jnp.transpose(xb, (0, 2, 4, 1, 3, 5))                        # (2B, H/P, W/P, C, P, P)
    patches = xb.reshape(ROWS, PATCH_DIM)
    patches = jnp.pad(patches, ((0, 0), (0, PK - PATCH_DIM))).astype(jnp.bfloat16)

    out = pl.pallas_call(
        _fused_kernel,
        out_shape=jax.ShapeDtypeStruct((8, 128), jnp.float32),
        in_specs=[
            pl.BlockSpec(memory_space=pltpu.MemorySpace.VMEM),   # patches   (ROWS, PK) bf16
            pl.BlockSpec(memory_space=pltpu.MemorySpace.VMEM),   # w_embed   (PK, F)    bf16
            pl.BlockSpec(memory_space=pltpu.MemorySpace.VMEM),   # head_pack (3, F)     f32
        ],
        out_specs=pl.BlockSpec(memory_space=pltpu.MemorySpace.VMEM),
    )(patches, w_embed_packed, head_pack)

    return out[:B, :1]                                                # (B, 1) quality


def make_params():
    k = jax.random.PRNGKey(42)
    k1, k2, k3 = jax.random.split(k, 3)
    w_embed = jax.random.normal(k1, (PATCH_DIM, F), jnp.float32) * 0.02
    w_proj = jax.random.normal(k2, (F, G), jnp.float32) * 0.02
    # nn.Linear(G+F, 1): weight [1, G+F] stored transposed as [G+F, 1], bias [1]
    head_w = jax.random.normal(k3, (G + F, 1), jnp.float32) * 0.02
    head_b = jnp.zeros((1,), jnp.float32)
    return dict(w_embed=w_embed, w_proj=w_proj, head_w=head_w, head_b=head_b)


if __name__ == "__main__":
    key = jax.random.PRNGKey(0)
    kg, kl = jax.random.split(key)
    x_global = jax.random.normal(kg, (B, C, H, W), jnp.float32)       # NCHW
    x_local = jax.random.normal(kl, (B, C, H, W), jnp.float32)        # NCHW
    params = make_params()

    # Frozen-weight prep runs exactly once; the jitted forward sees prepacked arrays.
    w_embed_packed, head_pack = prepare_params(params)
    forward = jax.jit(local_global_clip_iqa)

    quality = forward(x_global, x_local, w_embed_packed, head_pack)
    jax.block_until_ready(quality)

    # Plain-JAX reference (same bf16 MXU-input casts, f32 accumulation, f32 head).
    def ref_forward(xg, xl, p):
        we = p["w_embed"].astype(jnp.bfloat16)

        def patchify(x):
            xb_ = x.reshape(B, C, H // P, P, W // P, P)
            return jnp.transpose(xb_, (0, 2, 4, 1, 3, 5)).reshape(B, L, PATCH_DIM)

        def pooled_tokens(x):
            tok = jnp.dot(patchify(x).astype(jnp.bfloat16), we,
                          preferred_element_type=jnp.float32)          # (B, L, F)
            return jnp.mean(tok, axis=1)                               # (B, F) f32

        pooled_g = pooled_tokens(xg)
        pooled_l = pooled_tokens(xl)
        gf = pooled_g @ p["w_proj"]                                    # (B, G) f32
        feats = jnp.concatenate([gf, pooled_l], axis=1)                # (B, G+F)
        return feats @ p["head_w"] + p["head_b"]                       # (B, 1)

    ref = ref_forward(x_global, x_local, params)
    assert quality.shape == (B, 1)
    assert jnp.allclose(quality, ref, atol=2e-3, rtol=2e-2)
    print("KERNEL_OK")
</pallas_src>

<mosaic_0001>
module attributes {stable_mosaic.version = 11 : i64} {
  func.func @_fused_kernel(%arg0: memref<64x256xbf16, #tpu.memory_space<vmem>>, %arg1: memref<256x128xbf16, #tpu.memory_space<vmem>>, %arg2: memref<3x128xf32, #tpu.memory_space<vmem>>, %arg3: memref<8x128xf32, #tpu.memory_space<vmem>>) attributes {dimension_semantics = [], scalar_prefetch = 0 : i64, scratch_operands = 0 : i64, tpu.core_type = #tpu.core_type<tc>} {
    %c0 = arith.constant 0 : index
    %c0_0 = arith.constant 0 : index
    %0 = vector.load %arg0[%c0, %c0_0] : memref<64x256xbf16, #tpu.memory_space<vmem>>, vector<64x256xbf16>
    %c0_1 = arith.constant 0 : index
    %c0_2 = arith.constant 0 : index
    %1 = vector.load %arg1[%c0_1, %c0_2] : memref<256x128xbf16, #tpu.memory_space<vmem>>, vector<256x128xbf16>
    %cst = arith.constant dense<0.000000e+00> : vector<64x128xf32>
    %2 = tpu.matmul %0, %1, %cst {dimension_numbers = #tpu.dot_dimension_numbers<[1], [0], [0], [1], [0, 0, 1, 1], [], []>} : vector<64x256xbf16>, vector<256x128xbf16>, vector<64x128xf32> -> vector<64x128xf32>
    %3 = vector.shape_cast %2 : vector<64x128xf32> to vector<4x16x128xf32>
    %cst_3 = arith.constant dense<0.000000e+00> : vector<4x128xf32>
    %4 = vector.multi_reduction <add>, %3, %cst_3 [1] : vector<4x16x128xf32> to vector<4x128xf32>
    %cst_4 = arith.constant 6.250000e-02 : f32
    %5 = vector.broadcast %cst_4 : f32 to vector<4x128xf32>
    %6 = arith.mulf %4, %5 : vector<4x128xf32>
    %c0_5 = arith.constant 0 : index
    %c0_6 = arith.constant 0 : index
    %7 = vector.load %arg2[%c0_5, %c0_6] : memref<3x128xf32, #tpu.memory_space<vmem>>, vector<3x128xf32>
    %8 = vector.extract_strided_slice %6 {offsets = [0, 0], sizes = [2, 128], strides = [1, 1]} : vector<4x128xf32> to vector<2x128xf32>
    %9 = vector.extract_strided_slice %7 {offsets = [0, 0], sizes = [1, 128], strides = [1, 1]} : vector<3x128xf32> to vector<1x128xf32>
    %10 = vector.broadcast %9 : vector<1x128xf32> to vector<2x128xf32>
    %11 = arith.mulf %8, %10 : vector<2x128xf32>
    %cst_7 = arith.constant dense<0.000000e+00> : vector<2xf32>
    %12 = vector.multi_reduction <add>, %11, %cst_7 [1] : vector<2x128xf32> to vector<2xf32>
    %13 = vector.shape_cast %12 : vector<2xf32> to vector<2x1xf32>
    %14 = vector.extract_strided_slice %6 {offsets = [2, 0], sizes = [2, 128], strides = [1, 1]} : vector<4x128xf32> to vector<2x128xf32>
    %15 = vector.extract_strided_slice %7 {offsets = [1, 0], sizes = [1, 128], strides = [1, 1]} : vector<3x128xf32> to vector<1x128xf32>
    %16 = vector.broadcast %15 : vector<1x128xf32> to vector<2x128xf32>
    %17 = arith.mulf %14, %16 : vector<2x128xf32>
    %cst_8 = arith.constant dense<0.000000e+00> : vector<2xf32>
    %18 = vector.multi_reduction <add>, %17, %cst_8 [1] : vector<2x128xf32> to vector<2xf32>
    %19 = vector.shape_cast %18 : vector<2xf32> to vector<2x1xf32>
    %20 = arith.addf %13, %19 : vector<2x1xf32>
    %21 = vector.extract_strided_slice %7 {offsets = [2, 0], sizes = [1, 1], strides = [1, 1]} : vector<3x128xf32> to vector<1x1xf32>
    %22 = vector.broadcast %21 : vector<1x1xf32> to vector<2x1xf32>
    %23 = arith.addf %20, %22 : vector<2x1xf32>
    %24 = vector.shape_cast %23 : vector<2x1xf32> to vector<2x1xf32>
    %25 = vector.broadcast %24 : vector<2x1xf32> to vector<2x128xf32>
    %cst_9 = arith.constant 0.000000e+00 : f32
    %26 = vector.broadcast %cst_9 : f32 to vector<6x128xf32>
    %27 = tpu.concatenate %25, %26 in 0 : vector<2x128xf32>, vector<6x128xf32> -> vector<8x128xf32>
    %c0_10 = arith.constant 0 : index
    %c0_11 = arith.constant 0 : index
    %28 = vector.load %arg3[%c0_10, %c0_11] : memref<8x128xf32, #tpu.memory_space<vmem>>, vector<8x128xf32>
    tpu.vector_store %arg3[%c0_10, %c0_11], %27 {strides = array<i32>} : memref<8x128xf32, #tpu.memory_space<vmem>>, vector<8x128xf32>,
    return
  }
}

</mosaic_0001>

<llo_original>
// kernel: local_global_clip_iqa.1
$region0: #{local_global_clip_iqa.1}
  #allocation0 [shape = 'u32[]', space=smem, size = 0x4, offset = 0x4, fixed_abs, tag = 'smem constant byte address 0x4 - core index']
  #allocation1 [shape = 'u32[144,128]{1,0:T(1,128)}', space=vmem, size = 0x12000, scoped, tag = 'internal scratch']
  %s0 = inlined_call_operand.vmem [shape: bf16[64,256], index: 0, kind: input, shape index: {}]
  %s1 = inlined_call_operand.vmem [shape: bf16[256,128], index: 1, kind: input, shape index: {}]
  %s2 = inlined_call_operand.vmem [shape: f32[3,128], index: 2, kind: input, shape index: {}]
  %s3 = inlined_call_operand.vmem [shape: f32[8,128], index: 3, kind: output, shape index: {}]
  %s4 = sld [smem:[#allocation0]]
  $region22: #{local_global_clip_iqa.1} parent=0
    _
  %s6 = ssub.s32 1, %s4
  %s7 = scalar_select 0, %s6, %s4
  // Predicated region
  $region2: #{local_global_clip_iqa.1} parent=0 // pred_check
    _
  $region3: #{local_global_clip_iqa.1} parent=0 // pred_check_branch
    %9 = sbr.rel (0) target = $region5
  $region4: #{local_global_clip_iqa.1} parent=0 // pred_region
    _
  $region5: #{local_global_clip_iqa.1} parent=0 // pred_fallthru
    _
  // Predicated region
  $region6: #{local_global_clip_iqa.1} parent=0 // pred_check
    _
  $region7: #{local_global_clip_iqa.1} parent=0 // pred_check_branch
    %11 = sbr.rel (0) target = $region9
  $region8: #{local_global_clip_iqa.1} parent=0 // pred_region
    _
  $region9: #{local_global_clip_iqa.1} parent=0 // pred_fallthru
    _
  // Predicated region
  $region10: #{local_global_clip_iqa.1} parent=0 // pred_check
    _
  $region11: #{local_global_clip_iqa.1} parent=0 // pred_check_branch
    %13 = sbr.rel (0) target = $region13
  $region12: #{local_global_clip_iqa.1} parent=0 // pred_region
    _
  $region13: #{local_global_clip_iqa.1} parent=0 // pred_fallthru
    _
  %v15 = vld [vmem:[%s0] sm:$0xff]
  %v16 = vld [vmem:[%s0 + $0x8] sm:$0xff]
  %v17 = vld [vmem:[%s0 + $0x10] sm:$0xff]
  %v18 = vld [vmem:[%s0 + $0x18] sm:$0xff]
  %v19 = vld [vmem:[%s0 + $0x20] sm:$0xff]
  %v20 = vld [vmem:[%s0 + $0x28] sm:$0xff]
  %v21 = vld [vmem:[%s0 + $0x30] sm:$0xff]
  %v22 = vld [vmem:[%s0 + $0x38] sm:$0xff]
  %v23 = vld [vmem:[%s1] sm:$0xf]
  %v24 = vld [vmem:[%s1 + $0x4] sm:$0xf]
  %v25 = vld [vmem:[%s1 + $0x8] sm:$0xf]
  %v26 = vld [vmem:[%s1 + $0xc] sm:$0xf]
  %v27 = vld [vmem:[%s1 + $0x10] sm:$0xf]
  %v28 = vld [vmem:[%s1 + $0x14] sm:$0xf]
  %v29 = vld [vmem:[%s1 + $0x18] sm:$0xf]
  %v30 = vld [vmem:[%s1 + $0x1c] sm:$0xf]
  %v31 = vld [vmem:[%s1 + $0x20] sm:$0xf]
  %v32 = vld [vmem:[%s1 + $0x24] sm:$0xf]
  %v33 = vld [vmem:[%s1 + $0x28] sm:$0xf]
  %v34 = vld [vmem:[%s1 + $0x2c] sm:$0xf]
  %v35 = vld [vmem:[%s1 + $0x30] sm:$0xf]
  %v36 = vld [vmem:[%s1 + $0x34] sm:$0xf]
  %v37 = vld [vmem:[%s1 + $0x38] sm:$0xf]
  %v38 = vld [vmem:[%s1 + $0x3c] sm:$0xf]
  %v39 = vld [vmem:[%s1 + $0x40] sm:$0xf]
  %v40 = vld [vmem:[%s1 + $0x44] sm:$0xf]
  %v41 = vld [vmem:[%s1 + $0x48] sm:$0xf]
  %v42 = vld [vmem:[%s1 + $0x4c] sm:$0xf]
  %v43 = vld [vmem:[%s1 + $0x50] sm:$0xf]
  %v44 = vld [vmem:[%s1 + $0x54] sm:$0xf]
  %v45 = vld [vmem:[%s1 + $0x58] sm:$0xf]
  %v46 = vld [vmem:[%s1 + $0x5c] sm:$0xf]
  %v47 = vld [vmem:[%s1 + $0x60] sm:$0xf]
  %v48 = vld [vmem:[%s1 + $0x64] sm:$0xf]
  %v49 = vld [vmem:[%s1 + $0x68] sm:$0xf]
  %v50 = vld [vmem:[%s1 + $0x6c] sm:$0xf]
  %v51 = vld [vmem:[%s1 + $0x70] sm:$0xf]
  %v52 = vld [vmem:[%s1 + $0x74] sm:$0xf]
  %v53 = vld [vmem:[%s1 + $0x78] sm:$0xf]
  %v54 = vld [vmem:[%s1 + $0x7c] sm:$0xf]
  %v63 = vunpack.c.l.b16 %v15
  %v64 = vunpack.c.h.b16 %v15
  %v65 = vunpack.c.l.b16 %v16
  %v66 = vunpack.c.h.b16 %v16
  %v67 = vunpack.c.l.b16 %v17
  %v68 = vunpack.c.h.b16 %v17
  %v69 = vunpack.c.l.b16 %v18
  %v70 = vunpack.c.h.b16 %v18
  %v71 = vunpack.c.l.b16 %v19
  %v72 = vunpack.c.h.b16 %v19
  %v73 = vunpack.c.l.b16 %v20
  %v74 = vunpack.c.h.b16 %v20
  %v75 = vunpack.c.l.b16 %v21
  %v76 = vunpack.c.h.b16 %v21
  %v77 = vunpack.c.l.b16 %v22
  %v78 = vunpack.c.h.b16 %v22
  %v79 = vpack.c.b16 %v65, %v63
  %v80 = vpack.c.b16 %v66, %v64
  %v81 = vpack.c.b16 %v69, %v67
  %v82 = vpack.c.b16 %v70, %v68
  %v83 = vpack.c.b16 %v73, %v71
  %v84 = vpack.c.b16 %v74, %v72
  %v85 = vpack.c.b16 %v77, %v75
  %v86 = vpack.c.b16 %v78, %v76
  %v127 = vunpack.c.l.b16 %v23
  %v128 = vunpack.c.l.b16 %v24
  %v129 = vunpack.c.l.b16 %v25
  %v130 = vunpack.c.l.b16 %v26
  %v131 = vunpack.c.l.b16 %v27
  %v132 = vunpack.c.l.b16 %v28
  %v133 = vunpack.c.l.b16 %v29
  %v134 = vunpack.c.l.b16 %v30
  %v135 = vunpack.c.l.b16 %v31
  %v136 = vunpack.c.l.b16 %v32
  %v137 = vunpack.c.l.b16 %v33
  %v138 = vunpack.c.l.b16 %v34
  %v139 = vunpack.c.l.b16 %v35
  %v140 = vunpack.c.l.b16 %v36
  %v141 = vunpack.c.l.b16 %v37
  %v142 = vunpack.c.l.b16 %v38
  %v143 = vunpack.c.l.b16 %v39
  %v144 = vunpack.c.l.b16 %v40
  %v145 = vunpack.c.l.b16 %v41
  %v146 = vunpack.c.l.b16 %v42
  %v147 = vunpack.c.l.b16 %v43
  %v148 = vunpack.c.l.b16 %v44
  %v149 = vunpack.c.l.b16 %v45
  %v150 = vunpack.c.l.b16 %v46
  %v151 = vunpack.c.l.b16 %v47
  %v152 = vunpack.c.l.b16 %v48
  %v153 = vunpack.c.l.b16 %v49
  %v154 = vunpack.c.l.b16 %v50
  %v155 = vunpack.c.l.b16 %v51
  %v156 = vunpack.c.l.b16 %v52
  %v157 = vunpack.c.l.b16 %v53
  %v158 = vunpack.c.l.b16 %v54
  %v159 = vpack.c.b16 %v128, %v127
  %v160 = vpack.c.b16 %v130, %v129
  %v161 = vpack.c.b16 %v132, %v131
  %v162 = vpack.c.b16 %v134, %v133
  %v163 = vpack.c.b16 %v136, %v135
  %v164 = vpack.c.b16 %v138, %v137
  %v165 = vpack.c.b16 %v140, %v139
  %v166 = vpack.c.b16 %v142, %v141
  %v167 = vpack.c.b16 %v144, %v143
  %v168 = vpack.c.b16 %v146, %v145
  %v169 = vpack.c.b16 %v148, %v147
  %v170 = vpack.c.b16 %v150, %v149
  %v171 = vpack.c.b16 %v152, %v151
  %v172 = vpack.c.b16 %v154, %v153
  %v173 = vpack.c.b16 %v156, %v155
  %v174 = vpack.c.b16 %v158, %v157
  %191 = vmatprep.subr.bf16.mxu0 0
  %192 = vmatpush1.bf16.msra.mxu0 %v166
  %193 = vmatprep.subr.bf16.mxu0 0
  %194 = vmatpush1.bf16.msra.mxu0 %v165
  %195 = vmatprep.subr.bf16.mxu0 0
  %196 = vmatpush1.bf16.msra.mxu0 %v164
  %197 = vmatprep.subr.bf16.mxu0 0
  %198 = vmatpush1.bf16.msra.mxu0 %v163
  %199 = vmatprep.subr.bf16.mxu0 0
  %200 = vmatpush1.bf16.msra.mxu0 %v162
  %201 = vmatprep.subr.bf16.mxu0 0
  %202 = vmatpush1.bf16.msra.mxu0 %v161
  %203 = vmatprep.subr.bf16.mxu0 0
  %204 = vmatpush1.bf16.msra.mxu0 %v160
  %205 = vmatprep.subr.bf16.mxu0 0
  %206 = vmatpush1.bf16.msra.mxu0 %v159
  %207 = vmatprep.subr.bf16.mxu0 0
  %208 = vmatpush2.bf16.msra.mxu0 %v174
  %209 = vmatprep.subr.bf16.mxu0 0
  %210 = vmatpush2.bf16.msra.mxu0 %v173
  %211 = vmatprep.subr.bf16.mxu0 0
  %212 = vmatpush2.bf16.msra.mxu0 %v172
  %213 = vmatprep.subr.bf16.mxu0 0
  %214 = vmatpush2.bf16.msra.mxu0 %v171
  %215 = vmatprep.subr.bf16.mxu0 0
  %216 = vmatpush2.bf16.msra.mxu0 %v170
  %217 = vmatprep.subr.bf16.mxu0 0
  %218 = vmatpush2.bf16.msra.mxu0 %v169
  %219 = vmatprep.subr.bf16.mxu0 0
  %220 = vmatpush2.bf16.msra.mxu0 %v168
  %221 = vmatprep.subr.bf16.mxu0 0
  %222 = vmatpush2.bf16.msra.mxu0 %v167
  %223 = vmatprep.mubr.bf16.mxu0 %v80
  %224 = vmatmul.mubr.bf16.gmra.mxu0 %v79
  %v225 = vpop.f32.mrf.mxu0
  %v226 = vadd.f32 0.0, %v225
  %v227 = vpop.f32.mrf.mxu0
  %v228 = vpop.f32.mrf.mxu0
  %v229 = vadd.f32 0.0, %v228
  %v230 = vpop.f32.mrf.mxu0
  %231 = vmatprep.mubr.bf16.mxu0 %v82
  %232 = vmatmul.mubr.bf16.gmra.mxu0 %v81
  %v233 = vpop.f32.mrf.mxu0
  %v234 = vadd.f32 0.0, %v233
  %v235 = vpop.f32.mrf.mxu0
  %v236 = vpop.f32.mrf.mxu0
  %v237 = vadd.f32 0.0, %v236
  %v238 = vpop.f32.mrf.mxu0
  %239 = vmatprep.mubr.bf16.mxu0 %v84
  %240 = vmatmul.mubr.bf16.gmra.mxu0 %v83
  %v241 = vpop.f32.mrf.mxu0
  %v242 = vadd.f32 0.0, %v241
  %v243 = vpop.f32.mrf.mxu0
  %v244 = vpop.f32.mrf.mxu0
  %v245 = vadd.f32 0.0, %v244
  %v246 = vpop.f32.mrf.mxu0
  %247 = vmatprep.mubr.bf16.mxu0 %v86
  %248 = vmatmul.mubr.bf16.gmra.mxu0 %v85
  %v249 = vpop.f32.mrf.mxu0
  %v250 = vadd.f32 0.0, %v249
  %v251 = vpop.f32.mrf.mxu0
  %v252 = vpop.f32.mrf.mxu0
  %v253 = vadd.f32 0.0, %v252
  %v254 = vpop.f32.mrf.mxu0
  %255 = vdwg.mxu0
  %v256 = vadd.f32 %v226, %v229
  %v257 = vrot.slane %v256, 4
  %v258 = vadd.f32 %v256, %v257
  %v259 = vrot.slane %v258, 2
  %v260 = vadd.f32 %v258, %v259
  %v261 = vrot.slane %v260, 1
  %v262 = vadd.f32 %v260, %v261
  %v263 = vadd.f32 %v234, %v237
  %v264 = vrot.slane %v263, 4
  %v265 = vadd.f32 %v263, %v264
  %v266 = vrot.slane %v265, 2
  %v267 = vadd.f32 %v265, %v266
  %v268 = vrot.slane %v267, 1
  %v269 = vadd.f32 %v267, %v268
  %v270 = vadd.f32 %v242, %v245
  %v271 = vrot.slane %v270, 4
  %v272 = vadd.f32 %v270, %v271
  %v273 = vrot.slane %v272, 2
  %v274 = vadd.f32 %v272, %v273
  %v275 = vrot.slane %v274, 1
  %v276 = vadd.f32 %v274, %v275
  %v277 = vadd.f32 %v250, %v253
  %v278 = vrot.slane %v277, 4
  %v279 = vadd.f32 %v277, %v278
  %v280 = vrot.slane %v279, 2
  %v281 = vadd.f32 %v279, %v280
  %v282 = vrot.slane %v281, 1
  %v283 = vadd.f32 %v281, %v282
  %v284 = vmul.f32 %v262, 0.0625
  %v285 = vmul.f32 %v269, 0.0625
  %v286 = vmul.f32 %v276, 0.0625
  %v287 = vmul.f32 %v283, 0.0625
  %v288 = vld [vmem:[%s2] sm:$0x7]
  %v289 = vlaneseq
  %v290 = vshrl.u32 %v289, 7
  %v291 = vsub.s32 0, %v290
  %v292 = vrot.slane %v288, %v291
  %v293 = vmul.f32 %v284, %v292
  %v294 = vmul.f32 %v285, %v292
  %v297 = vrot.slane %v294, 7
  %vm298 = vcmask 1041409
  %v299 = vsel %vm298, %v297, %v293
  %vm301 = vcmask 1041408
  %v302 = vsel %vm301, %v299, 0.0
  %303 = vadd.xlane.f32.xlu0 %v302
  %v304 = vpop.xlane.xlu0 %303
  %v305 = vlaneseq
  %v306 = vshrl.u32 %v305, 7
  %v307 = vsub.s32 1, %v306
  %v308 = vrot.slane %v288, %v307
  %v309 = vmul.f32 %v286, %v308
  %v310 = vmul.f32 %v287, %v308
  %v313 = vrot.slane %v310, 7
  %v314 = vsel %vm298, %v313, %v309
  %v316 = vsel %vm301, %v314, 0.0
  %317 = vadd.xlane.f32.xlu0 %v316
  %v318 = vpop.xlane.xlu0 %317
  %v319 = vadd.f32 %v304, %v318
  %v320 = vlaneseq
  %v321 = vshrl.u32 %v320, 7
  %v322 = vsub.s32 2, %v321
  %v323 = vrot.slane %v288, %v322
  %v324 = vadd.f32 %v319, %v323
  %326 = vset.pattern.permute.xlu0 0
  %327 = vperm.xlu0 %326, %v324
  %v328 = vpop.permute.xlu0 %327
  %v330 = vsel %vm301, %v328, 0.0
  %331 = vst [vmem:[%s3] sm:$0xff] %v330
  // Predicated region
  $region14: #{local_global_clip_iqa.1} parent=0 // pred_check
    _
  $region15: #{local_global_clip_iqa.1} parent=0 // pred_check_branch
    %333 = sbr.rel (0) target = $region17
  $region16: #{local_global_clip_iqa.1} parent=0 // pred_region
    _
  $region17: #{local_global_clip_iqa.1} parent=0 // pred_fallthru
    _
  // Predicated region
  $region18: #{local_global_clip_iqa.1} parent=0 // pred_check
    _
  $region19: #{local_global_clip_iqa.1} parent=0 // pred_check_branch
    %335 = sbr.rel (0) target = $region21
  $region20: #{local_global_clip_iqa.1} parent=0 // pred_region
    _
  $region21: #{local_global_clip_iqa.1} parent=0 // pred_fallthru
    _

</llo_original>
